<compile_context>
chip_gen: v6e
topology: v6e:2x2x1
jax: 0.10.0
libtpu: 0.0.40
codegen_flags: <defaults>
</compile_context>

<pallas_src>
import functools
import math

import jax
import jax.numpy as jnp
from jax import lax
from jax.experimental import pallas as pl
from jax.experimental.pallas import tpu as pltpu


_LANES = 128
_SUBLANES = 8
_CHUNK = _SUBLANES * _LANES           # 1024 elements = one (8, 128) f32 slab
_MAX_BLOCK_ROWS = 4096                # 4096 x 128 f32 = 2 MiB per input tile
_MIN_PALLAS_ELEMENTS = 1 << 18        # below ~1 MiB total, plain XLA is faster


def _hinge_kernel(x_ref, y_ref, o_ref, *, block_rows, valid_rows_last):
    """One (block_rows, 128) block -> (8, 128) partial hinge sum.

    valid_rows_last: None if every block is full; otherwise the number of valid
    rows in the (partial) last block -- only that block gets masked.
    """
    x = x_ref[...].astype(jnp.float32)
    y = y_ref[...].astype(jnp.float32)
    hinge = jnp.maximum(jnp.float32(1.0) - y * x, jnp.float32(0.0))

    def _reduce(h):
        # (block_rows, 128) -> (block_rows//8, 8, 128) -> sum over axis 0:
        # pure vreg-wise VALU adds, no per-step XLU reduction.
        return h.reshape(block_rows // _SUBLANES, _SUBLANES, _LANES).sum(axis=0)

    if valid_rows_last is None:
        o_ref[...] = _reduce(hinge)
    else:
        i = pl.program_id(0)
        last = pl.num_programs(0) - 1

        @pl.when(i < last)
        def _():
            o_ref[...] = _reduce(hinge)

        @pl.when(i == last)
        def _():
            # Row-only mask against a static threshold (single iota, no flat
            # int32 index construction, no overflow risk).
            rix = lax.broadcasted_iota(jnp.int32, (block_rows, _LANES), 0)
            h = jnp.where(rix < valid_rows_last, hinge, jnp.float32(0.0))
            o_ref[...] = _reduce(h)


def _choose_block_rows(rows, max_block_rows):
    """Pick (block_rows, valid_rows_last). Prefer a divisor of rows so there is
    no partial last block (-> no in-kernel masking)."""
    max_rows = min(max_block_rows, rows)
    max_rows -= max_rows % _SUBLANES
    max_rows = max(max_rows, _SUBLANES)

    r8 = rows // _SUBLANES
    best = None
    for d in range(max_rows // _SUBLANES, 0, -1):
        if r8 % d == 0:
            best = d * _SUBLANES
            break
    if best is not None and best * 4 >= max_rows:
        return best, None                      # full blocks, no masking

    block_rows = max_rows
    rem = rows % block_rows
    return block_rows, (rem if rem else None)


def _pallas_hinge_sum(x2, y2, block_rows, num_blocks, valid_rows_last):
    kernel = functools.partial(
        _hinge_kernel, block_rows=block_rows, valid_rows_last=valid_rows_last)

    partials = pl.pallas_call(
        kernel,
        out_shape=jax.ShapeDtypeStruct((num_blocks * _SUBLANES, _LANES),
                                       jnp.float32),
        grid_spec=pltpu.PrefetchScalarGridSpec(
            num_scalar_prefetch=0,
            grid=(num_blocks,),
            in_specs=[
                pl.BlockSpec((block_rows, _LANES), lambda i: (i, 0)),
                pl.BlockSpec((block_rows, _LANES), lambda i: (i, 0)),
            ],
            out_specs=pl.BlockSpec((_SUBLANES, _LANES), lambda i: (i, 0)),
        ),
        compiler_params=pltpu.CompilerParams(
            dimension_semantics=("parallel",),   # megacore-shardable
        ),
    )(x2, y2)

    # Tiny epilogue: num_blocks * 1024 floats.
    return jnp.sum(partials)


def hinge_loss(x, y, *, force_pallas=False, max_block_rows=_MAX_BLOCK_ROWS):
    """loss = sum(max(1 - y*x, 0)) with numpy-style broadcasting of y vs x."""
    x = jnp.asarray(x)
    y = jnp.asarray(y)

    def _norm(a):
        # Stream native 16/32-bit float dtypes; everything else via f32.
        if a.dtype in (jnp.bfloat16, jnp.float16, jnp.float32):
            return a
        return a.astype(jnp.float32)

    x = _norm(x)
    y = _norm(y)

    shape = jnp.broadcast_shapes(x.shape, y.shape)
    # TODO(synk): when y is a genuinely-broadcast small label vector, express
    # the broadcast via the BlockSpec index_map instead of materializing it.
    x = jnp.broadcast_to(x, shape)
    y = jnp.broadcast_to(y, shape)

    n = math.prod(shape) if shape else 1
    if n == 0:
        return jnp.float32(0.0)

    def _jnp_hinge(a, b):
        return jnp.sum(jnp.maximum(
            jnp.float32(1.0) - b.astype(jnp.float32) * a.astype(jnp.float32),
            jnp.float32(0.0)))

    if (n < _MIN_PALLAS_ELEMENTS and not force_pallas) or n < _CHUNK:
        # pallas_call fixed cost dominates tiny inputs; plain XLA is faster.
        return _jnp_hinge(x, y)

    xf = x.reshape(-1)
    yf = y.reshape(-1)

    # Aligned prefix handled by the kernel; the <1024-element ragged tail is a
    # tiny jnp epilogue (avoids rewriting the whole array with jnp.pad).
    n_main = (n // _CHUNK) * _CHUNK
    tail_loss = jnp.float32(0.0)
    if n_main != n:
        tail_loss = _jnp_hinge(xf[n_main:], yf[n_main:])
        xf = xf[:n_main]
        yf = yf[:n_main]

    rows = n_main // _LANES                     # multiple of 8
    x2 = xf.reshape(rows, _LANES)
    y2 = yf.reshape(rows, _LANES)

    block_rows, valid_rows_last = _choose_block_rows(rows, max_block_rows)
    num_blocks = -(-rows // block_rows)         # ceil div

    main_loss = _pallas_hinge_sum(x2, y2, block_rows, num_blocks,
                                  valid_rows_last)
    return main_loss + tail_loss


if __name__ == "__main__":
    key = jax.random.PRNGKey(0)
    k1, k2, k3, k4 = jax.random.split(key, 4)

    def _ref(a, b):
        return jnp.sum(jnp.maximum(
            1.0 - b.astype(jnp.float32) * a.astype(jnp.float32), 0.0))

    # Case 1: module-implied small shape, forced through the Pallas path.
    x1 = jax.random.normal(k1, (2, 4, 16, 16), dtype=jnp.float32)
    y1 = jnp.sign(jax.random.normal(k2, (2, 4, 16, 16), dtype=jnp.float32))
    y1 = jnp.where(y1 == 0, 1.0, y1)            # labels in {-1, +1}
    out1 = hinge_loss(x1, y1, force_pallas=True)
    jax.block_until_ready(out1)
    ref1 = _ref(x1, y1)
    assert jnp.allclose(out1, ref1, rtol=1e-5, atol=1e-5), (out1, ref1)

    # Case 2: ragged shape (tail epilogue) + partial last block (gated row
    # mask), bf16 streamed natively and upcast in-kernel.
    x2 = jax.random.normal(k3, (7, 3, 33, 65), dtype=jnp.bfloat16)
    y2 = jnp.sign(jax.random.normal(k4, (7, 3, 33, 65), dtype=jnp.float32))
    y2 = jnp.where(y2 == 0, 1.0, y2).astype(jnp.bfloat16)
    out2 = hinge_loss(x2, y2, force_pallas=True, max_block_rows=64)
    jax.block_until_ready(out2)
    ref2 = _ref(x2, y2)
    assert jnp.allclose(out2, ref2, rtol=1e-4, atol=1e-2), (out2, ref2)

    print("KERNEL_OK")
</pallas_src>

<mosaic_0001>
module attributes {stable_mosaic.version = 11 : i64} {
  func.func @_hinge_kernel(%arg0: i32, %arg1: memref<16x128xf32, #tpu.memory_space<vmem>>, %arg2: memref<16x128xf32, #tpu.memory_space<vmem>>, %arg3: memref<8x128xf32, #tpu.memory_space<vmem>>) attributes {dimension_semantics = [#tpu.dimension_semantics<parallel>], iteration_bounds = array<i64: 1>, scalar_prefetch = 0 : i64, scratch_operands = 0 : i64, tpu.core_type = #tpu.core_type<tc>, window_params = [{transform_indices = @transform_0, window_bounds = array<i64: 16, 128>}, {transform_indices = @transform_1, window_bounds = array<i64: 16, 128>}, {transform_indices = @transform_2, window_bounds = array<i64: 8, 128>}]} {
    %c0 = arith.constant 0 : index
    %c0_0 = arith.constant 0 : index
    %0 = vector.load %arg1[%c0, %c0_0] : memref<16x128xf32, #tpu.memory_space<vmem>>, vector<16x128xf32>
    %c0_1 = arith.constant 0 : index
    %c0_2 = arith.constant 0 : index
    %1 = vector.load %arg2[%c0_1, %c0_2] : memref<16x128xf32, #tpu.memory_space<vmem>>, vector<16x128xf32>
    %2 = arith.mulf %1, %0 : vector<16x128xf32>
    %cst = arith.constant 1.000000e+00 : f32
    %3 = vector.broadcast %cst : f32 to vector<16x128xf32>
    %4 = arith.subf %3, %2 : vector<16x128xf32>
    %cst_3 = arith.constant 0.000000e+00 : f32
    %5 = vector.broadcast %cst_3 : f32 to vector<16x128xf32>
    %6 = arith.maximumf %4, %5 : vector<16x128xf32>
    %7 = vector.shape_cast %6 : vector<16x128xf32> to vector<2x8x128xf32>
    %cst_4 = arith.constant dense<0.000000e+00> : vector<8x128xf32>
    %8 = vector.multi_reduction <add>, %7, %cst_4 [0] : vector<2x8x128xf32> to vector<8x128xf32>
    %c0_5 = arith.constant 0 : index
    %c0_6 = arith.constant 0 : index
    %9 = vector.load %arg3[%c0_5, %c0_6] : memref<8x128xf32, #tpu.memory_space<vmem>>, vector<8x128xf32>
    tpu.vector_store %arg3[%c0_5, %c0_6], %8 {strides = array<i32>} : memref<8x128xf32, #tpu.memory_space<vmem>>, vector<8x128xf32>,
    return
  }
  func.func @transform_0(%arg0: i32) -> (i32, i32) {
    %c0_i32 = arith.constant 0 : i32
    %c0_i32_0 = arith.constant 0 : i32
    return %arg0, %c0_i32 : i32, i32
  }
  func.func @transform_1(%arg0: i32) -> (i32, i32) {
    %c0_i32 = arith.constant 0 : i32
    %c0_i32_0 = arith.constant 0 : i32
    return %arg0, %c0_i32 : i32, i32
  }
  func.func @transform_2(%arg0: i32) -> (i32, i32) {
    %c0_i32 = arith.constant 0 : i32
    %c0_i32_0 = arith.constant 0 : i32
    return %arg0, %c0_i32 : i32, i32
  }
}

</mosaic_0001>

<llo_original>
// kernel: tpu_custom_call.1
$region0: #{tpu_custom_call.1}
  #allocation0 [shape = 'u32[]', space=smem, size = 0x4, offset = 0x4, fixed_abs, tag = 'smem constant byte address 0x4 - core index']
  #allocation1 [shape = 'u32[144,128]{1,0:T(1,128)}', space=vmem, size = 0x12000, scoped, tag = 'internal scratch']
  %s0 = inlined_call_operand.hbm [shape: f32[16,128], index: 0, kind: input, shape index: {}]
  %s1 = inlined_call_operand.hbm [shape: f32[16,128], index: 1, kind: input, shape index: {}]
  %s2 = inlined_call_operand.hbm [shape: f32[8,128], index: 2, kind: output, shape index: {}]
  %s3 = sld [smem:[#allocation0]]
  $region26: #{tpu_custom_call.1} parent=0
    _
  %s5 = ssub.s32 1, %s3
  %s6 = scalar_select 0, %s5, %s3
  $region1: #{tpu_custom_call.1} parent=0
    #allocation2 [shape = 'u8[8192]{0}', space=vmem, size = 0x2000, scoped, tag = 'input window, operand 0, single buffered']
    #allocation3 [shape = 's32[1]{0}', space=sflag, size = 0x4, scoped, tag = 'scoped memory for tpu_custom_call.1']
    #allocation4 [shape = 's32[1]{0}', space=sflag, size = 0x4, scoped, tag = 'scoped memory for tpu_custom_call.1']
    #allocation5 [shape = 'u8[8192]{0}', space=vmem, size = 0x2000, scoped, tag = 'input window, operand 1, single buffered']
    #allocation6 [shape = 's32[1]{0}', space=sflag, size = 0x4, scoped, tag = 'scoped memory for tpu_custom_call.1']
    #allocation7 [shape = 'u8[4096]{0}', space=vmem, size = 0x1000, scoped, tag = 'output window, operand 0, single buffered']
    %7 = vsyncpa [#allocation3], 0
    %8 = vsyncpa [#allocation6], 0
    %9 = vsyncpa [#allocation4], 0
    // Predicated region
    $region2: #{tpu_custom_call.1} parent=1 // pred_check
      _
    $region3: #{tpu_custom_call.1} parent=1 // pred_check_branch
      %11 = sbr.rel (0) target = $region5
    $region4: #{tpu_custom_call.1} parent=1 // pred_region
      %s13 = ssub.s32 256, 256
      %14 = vsyncadd [#allocation3], %s13
      %s15 = sshll.u32 [#allocation2], 4
      %s16 = int_to_ptr.vmem [resolvable:$true] %s15
      %21 = dma.hbm_to_vmem [thread:$0]  %s0, 256, %s16, [#allocation3], 128, 128, 8
    $region5: #{tpu_custom_call.1} parent=1 // pred_fallthru
      _
    // Predicated region
    $region6: #{tpu_custom_call.1} parent=1 // pred_check
      _
    $region7: #{tpu_custom_call.1} parent=1 // pred_check_branch
      %23 = sbr.rel (0) target = $region9
    $region8: #{tpu_custom_call.1} parent=1 // pred_region
      %s25 = ssub.s32 256, 256
      %26 = vsyncadd [#allocation6], %s25
      %s27 = sshll.u32 [#allocation5], 4
      %s28 = int_to_ptr.vmem [resolvable:$true] %s27
      %33 = dma.hbm_to_vmem [thread:$0]  %s1, 256, %s28, [#allocation6], 128, 128, 8
    $region9: #{tpu_custom_call.1} parent=1 // pred_fallthru
      _
    // Predicated region
    $region10: #{tpu_custom_call.1} parent=1 // pred_check
      _
    $region11: #{tpu_custom_call.1} parent=1 // pred_check_branch
      %35 = sbr.rel (0) target = $region13
    $region12: #{tpu_custom_call.1} parent=1 // pred_region
      %36 = dma.done [#allocation3], 256
    $region13: #{tpu_custom_call.1} parent=1 // pred_fallthru
      _
    // Predicated region
    $region14: #{tpu_custom_call.1} parent=1 // pred_check
      _
    $region15: #{tpu_custom_call.1} parent=1 // pred_check_branch
      %38 = sbr.rel (0) target = $region17
    $region16: #{tpu_custom_call.1} parent=1 // pred_region
      %39 = dma.done [#allocation6], 256
    $region17: #{tpu_custom_call.1} parent=1 // pred_fallthru
      _
    %v40 = vld [vmem:[#allocation2] sm:$0xff]
    %v41 = vld [vmem:[#allocation2 + $0x8] sm:$0xff]
    %v42 = vld [vmem:[#allocation5] sm:$0xff]
    %v43 = vld [vmem:[#allocation5 + $0x8] sm:$0xff]
    %v44 = vmul.f32 %v42, %v40
    %v45 = vmul.f32 %v43, %v41
    %v46 = vsub.f32 1.0, %v44
    %v47 = vsub.f32 1.0, %v45
    %v48 = vmax.f32 %v46, 0.0
    %v49 = vmax.f32 %v47, 0.0
    %v50 = vadd.f32 %v48, %v49
    %51 = vst [vmem:[#allocation7] sm:$0xff] %v50
    // Predicated region
    $region18: #{tpu_custom_call.1} parent=1 // pred_check
      _
    $region19: #{tpu_custom_call.1} parent=1 // pred_check_branch
      %53 = sbr.rel (0) target = $region21
    $region20: #{tpu_custom_call.1} parent=1 // pred_region
      %s55 = ssub.s32 128, 128
      %56 = vsyncadd [#allocation4], %s55
      %s58 = sshll.u32 [#allocation7], 4
      %s59 = int_to_ptr.vmem [resolvable:$true] %s58
      %61 = dma.vmem_to_hbm [thread:$0]  %s59, 128, %s2, [#allocation4]
    $region21: #{tpu_custom_call.1} parent=1 // pred_fallthru
      _
    // Predicated region
    $region22: #{tpu_custom_call.1} parent=1 // pred_check
      _
    $region23: #{tpu_custom_call.1} parent=1 // pred_check_branch
      %63 = sbr.rel (0) target = $region25
    $region24: #{tpu_custom_call.1} parent=1 // pred_region
      %64 = dma.done [#allocation4], 128
    $region25: #{tpu_custom_call.1} parent=1 // pred_fallthru
      _
    %65 = vsyncpa [#allocation3], 1
    %66 = vsyncpa [#allocation6], 1
    %67 = vsyncpa [#allocation4], 1

</llo_original>
